<compile_context>
chip_gen: v5e
topology: v5e:2x2
jax: 0.10.0
libtpu: 0.0.40
codegen_flags: <defaults>
</compile_context>

<pallas_src>
import jax
import jax.numpy as jnp
from jax import lax
from jax.experimental import pallas as pl
from jax.experimental.pallas import tpu as pltpu


def _make_score_kernel(chunk):
    """Kernel over one (TB, D) batch tile, stripped into `chunk`-row pieces."""

    def kernel(hh_ref, ht_ref, th_ref, tt_ref, r_ref, ri_ref, o_ref):
        tb = hh_ref.shape[0]          # static block size
        n_sub = tb // chunk           # static trip count

        def body(c, carry):
            s = pl.multiple_of(c * chunk, chunk)
            rows = pl.ds(s, chunk)
            # Upcast to f32 in-kernel (inputs may be bf16; v5e VPU has no bf16).
            hh = hh_ref[rows, :].astype(jnp.float32)
            ht = ht_ref[rows, :].astype(jnp.float32)
            th = th_ref[rows, :].astype(jnp.float32)
            tt = tt_ref[rows, :].astype(jnp.float32)
            r = r_ref[rows, :].astype(jnp.float32)
            ri = ri_ref[rows, :].astype(jnp.float32)
            # Fused forward + inverse triple products (VPU), single lane reduce (XLU).
            prod = hh * r * tt + ht * ri * th              # [chunk, D] f32
            score = 0.5 * jnp.sum(prod, axis=1, keepdims=True)   # [chunk, 1]
            o_ref[rows, :] = jnp.clip(score, -20.0, 20.0)
            return carry

        lax.fori_loop(0, n_sub, body, 0)

    return kernel


def _vmem_budget_bytes():
    """Per-generation VMEM budget for the double-buffered blocks."""
    try:
        kind = jax.devices()[0].device_kind.lower()
    except Exception:
        kind = ""
    if "v6" in kind:
        return 40 * 1024 * 1024
    if "7x" in kind or "v7" in kind:
        return 24 * 1024 * 1024       # ~per-TC share of v7x's 64 MiB VMEM
    if "v5" in kind:
        return 12 * 1024 * 1024
    return 12 * 1024 * 1024           # conservative default


def _pick_batch_tile(batch, emb_dim, in_itemsize, budget_bytes, max_tile):
    """Largest multiple-of-128 batch tile whose double-buffered blocks fit the
    budget.  Accounts for lane padding of the minor dim to 128 in VMEM."""
    d_pad = ((emb_dim + 127) // 128) * 128
    # 2 buffers x (6 input blocks + 1 output block padded to 128 lanes, f32).
    per_row = 2 * (6 * d_pad * in_itemsize + 128 * 4)
    tb = budget_bytes // per_row
    tb = max(128, min(max_tile, (tb // 128) * 128))
    bp = ((batch + 127) // 128) * 128
    return min(tb, bp)


def simple_forward_pallas(ent_h_embs, ent_t_embs, rel_embs, rel_inv_embs,
                          heads, rels, tails,
                          compute_dtype=jnp.bfloat16, max_batch_tile=4096):
    """SimplE.forward (learning_rel != 'freeze'). Returns [B] float32 scores."""
    B = heads.shape[0]
    D = ent_h_embs.shape[1]
    in_itemsize = jnp.dtype(compute_dtype).itemsize

    budget = _vmem_budget_bytes()
    TB = _pick_batch_tile(B, D, in_itemsize, budget, max_batch_tile)
    n_tiles = pl.cdiv(B, TB)
    Bp = n_tiles * TB                 # always a multiple of 128

    # Pad only the tiny index vectors (index 0 is always valid; the extra rows
    # are sliced off after the kernel).  The big gathered data is produced
    # already tile-aligned -> no jnp.pad pass over the slab.
    if Bp != B:
        pad = (0, Bp - B)
        heads = jnp.pad(heads, pad)
        rels = jnp.pad(rels, pad)
        tails = jnp.pad(tails, pad)

    # Embedding row gathers (plain-JAX glue), cast to the carrying dtype so the
    # intermediate written/read in HBM is half-width for bf16.
    hh = jnp.take(ent_h_embs, heads, axis=0).astype(compute_dtype)      # [Bp, D]
    ht = jnp.take(ent_h_embs, tails, axis=0).astype(compute_dtype)      # [Bp, D]
    th = jnp.take(ent_t_embs, heads, axis=0).astype(compute_dtype)      # [Bp, D]
    tt = jnp.take(ent_t_embs, tails, axis=0).astype(compute_dtype)      # [Bp, D]
    r = jnp.take(rel_embs, rels, axis=0).astype(compute_dtype)          # [Bp, D]
    r_inv = jnp.take(rel_inv_embs, rels, axis=0).astype(compute_dtype)  # [Bp, D]

    chunk = 256 if TB % 256 == 0 else 128
    in_spec = pl.BlockSpec((TB, D), lambda i: (i, 0))

    out = pl.pallas_call(
        _make_score_kernel(chunk),
        out_shape=jax.ShapeDtypeStruct((Bp, 1), jnp.float32),
        grid=(n_tiles,),
        in_specs=[in_spec] * 6,
        out_specs=pl.BlockSpec((TB, 1), lambda i: (i, 0)),
        compiler_params=pltpu.CompilerParams(
            # TODO(synk): switch to pltpu.CORE_PARALLEL on v7x if a trace shows
            # one TensorCore idle with plain "parallel".
            dimension_semantics=("parallel",),
            vmem_limit_bytes=budget + 8 * 1024 * 1024),
    )(hh, ht, th, tt, r, r_inv)
    return out[:B, 0]


def simple_forward_ref(ent_h_embs, ent_t_embs, rel_embs, rel_inv_embs,
                       heads, rels, tails):
    """Pure-JAX reference mirroring the PyTorch forward (f32)."""
    hh = ent_h_embs[heads]
    ht = ent_h_embs[tails]
    th = ent_t_embs[heads]
    tt = ent_t_embs[tails]
    r = rel_embs[rels]
    r_inv = rel_inv_embs[rels]
    for_prod = jnp.sum(hh * r * tt, axis=1)
    inv_prod = jnp.sum(ht * r_inv * th, axis=1)
    return jnp.clip((for_prod + inv_prod) / 2.0, -20.0, 20.0)


if __name__ == "__main__":
    # Deterministic synthetic parameters (args.init_type == 'normal',
    # init_scale = 0.1) and inputs.
    num_ent, num_rel, emb_dim, batch = 10, 5, 32, 8

    key = jax.random.PRNGKey(0)
    k1, k2, k3, k4, k5, k6, k7 = jax.random.split(key, 7)

    ent_h_embs = 0.1 * jax.random.normal(k1, (num_ent, emb_dim), jnp.float32)
    ent_t_embs = 0.1 * jax.random.normal(k2, (num_ent, emb_dim), jnp.float32)
    rel_embs = 0.1 * jax.random.normal(k3, (num_rel, emb_dim), jnp.float32)
    rel_inv_embs = 0.1 * jax.random.normal(k4, (num_rel, emb_dim), jnp.float32)

    heads = jax.random.randint(k5, (batch,), 0, num_ent, jnp.int32)
    rels = jax.random.randint(k6, (batch,), 0, num_rel, jnp.int32)
    tails = jax.random.randint(k7, (batch,), 0, num_ent, jnp.int32)

    out = simple_forward_pallas(ent_h_embs, ent_t_embs, rel_embs, rel_inv_embs,
                                heads, rels, tails)
    out = jax.block_until_ready(out)
    ref = simple_forward_ref(ent_h_embs, ent_t_embs, rel_embs, rel_inv_embs,
                             heads, rels, tails)
    assert out.shape == (batch,)
    assert jnp.allclose(out, ref, atol=1e-3, rtol=1e-2)

    # Second check: batch not a multiple of the tile + multi-tile grid path
    # (forced TB=128 so the 1-D grid has 3 steps and index padding is used).
    batch2 = 300
    kh, kr, kt = jax.random.split(jax.random.PRNGKey(1), 3)
    heads2 = jax.random.randint(kh, (batch2,), 0, num_ent, jnp.int32)
    rels2 = jax.random.randint(kr, (batch2,), 0, num_rel, jnp.int32)
    tails2 = jax.random.randint(kt, (batch2,), 0, num_ent, jnp.int32)

    out2 = simple_forward_pallas(ent_h_embs, ent_t_embs, rel_embs, rel_inv_embs,
                                 heads2, rels2, tails2, max_batch_tile=128)
    out2 = jax.block_until_ready(out2)
    ref2 = simple_forward_ref(ent_h_embs, ent_t_embs, rel_embs, rel_inv_embs,
                              heads2, rels2, tails2)
    assert out2.shape == (batch2,)
    assert jnp.allclose(out2, ref2, atol=1e-3, rtol=1e-2)

    print("KERNEL_OK")
</pallas_src>

<mosaic_0001>
module attributes {stable_mosaic.version = 11 : i64} {
  func.func @kernel(%arg0: i32, %arg1: memref<128x32xbf16, #tpu.memory_space<vmem>>, %arg2: memref<128x32xbf16, #tpu.memory_space<vmem>>, %arg3: memref<128x32xbf16, #tpu.memory_space<vmem>>, %arg4: memref<128x32xbf16, #tpu.memory_space<vmem>>, %arg5: memref<128x32xbf16, #tpu.memory_space<vmem>>, %arg6: memref<128x32xbf16, #tpu.memory_space<vmem>>, %arg7: memref<128x1xf32, #tpu.memory_space<vmem>>) attributes {dimension_semantics = [#tpu.dimension_semantics<parallel>], iteration_bounds = array<i64: 1>, scalar_prefetch = 0 : i64, scratch_operands = 0 : i64, tpu.core_type = #tpu.core_type<tc>, window_params = [{transform_indices = @transform_0, window_bounds = array<i64: 128, 32>}, {transform_indices = @transform_1, window_bounds = array<i64: 128, 32>}, {transform_indices = @transform_2, window_bounds = array<i64: 128, 32>}, {transform_indices = @transform_3, window_bounds = array<i64: 128, 32>}, {transform_indices = @transform_4, window_bounds = array<i64: 128, 32>}, {transform_indices = @transform_5, window_bounds = array<i64: 128, 32>}, {transform_indices = @transform_6, window_bounds = array<i64: 128, 1>}]} {
    %c0_i32 = arith.constant 0 : i32
    %c128_i32 = arith.constant 128 : i32
    %0 = arith.muli %c0_i32, %c128_i32 : i32
    %1 = tpu.assume_multiple %0, 128 : i32
    %2 = arith.index_cast %1 : i32 to index
    %c0 = arith.constant 0 : index
    %3 = vector.load %arg1[%2, %c0] : memref<128x32xbf16, #tpu.memory_space<vmem>>, vector<128x32xbf16>
    %4 = arith.extf %3 : vector<128x32xbf16> to vector<128x32xf32>
    %5 = arith.index_cast %1 : i32 to index
    %c0_0 = arith.constant 0 : index
    %6 = vector.load %arg2[%5, %c0_0] : memref<128x32xbf16, #tpu.memory_space<vmem>>, vector<128x32xbf16>
    %7 = arith.extf %6 : vector<128x32xbf16> to vector<128x32xf32>
    %8 = arith.index_cast %1 : i32 to index
    %c0_1 = arith.constant 0 : index
    %9 = vector.load %arg3[%8, %c0_1] : memref<128x32xbf16, #tpu.memory_space<vmem>>, vector<128x32xbf16>
    %10 = arith.extf %9 : vector<128x32xbf16> to vector<128x32xf32>
    %11 = arith.index_cast %1 : i32 to index
    %c0_2 = arith.constant 0 : index
    %12 = vector.load %arg4[%11, %c0_2] : memref<128x32xbf16, #tpu.memory_space<vmem>>, vector<128x32xbf16>
    %13 = arith.extf %12 : vector<128x32xbf16> to vector<128x32xf32>
    %14 = arith.index_cast %1 : i32 to index
    %c0_3 = arith.constant 0 : index
    %15 = vector.load %arg5[%14, %c0_3] : memref<128x32xbf16, #tpu.memory_space<vmem>>, vector<128x32xbf16>
    %16 = arith.extf %15 : vector<128x32xbf16> to vector<128x32xf32>
    %17 = arith.index_cast %1 : i32 to index
    %c0_4 = arith.constant 0 : index
    %18 = vector.load %arg6[%17, %c0_4] : memref<128x32xbf16, #tpu.memory_space<vmem>>, vector<128x32xbf16>
    %19 = arith.extf %18 : vector<128x32xbf16> to vector<128x32xf32>
    %20 = arith.mulf %4, %16 : vector<128x32xf32>
    %21 = arith.mulf %20, %13 : vector<128x32xf32>
    %22 = arith.mulf %7, %19 : vector<128x32xf32>
    %23 = arith.mulf %22, %10 : vector<128x32xf32>
    %24 = arith.addf %21, %23 : vector<128x32xf32>
    %cst = arith.constant dense<0.000000e+00> : vector<128xf32>
    %25 = vector.multi_reduction <add>, %24, %cst [1] : vector<128x32xf32> to vector<128xf32>
    %26 = vector.shape_cast %25 : vector<128xf32> to vector<128x1xf32>
    %cst_5 = arith.constant 5.000000e-01 : f32
    %27 = vector.broadcast %cst_5 : f32 to vector<128x1xf32>
    %28 = arith.mulf %27, %26 : vector<128x1xf32>
    %cst_6 = arith.constant -2.000000e+01 : f32
    %cst_7 = arith.constant 2.000000e+01 : f32
    %29 = vector.broadcast %cst_6 : f32 to vector<128x1xf32>
    %30 = arith.maximumf %29, %28 : vector<128x1xf32>
    %31 = vector.broadcast %cst_7 : f32 to vector<128x1xf32>
    %32 = arith.minimumf %31, %30 : vector<128x1xf32>
    %33 = arith.index_cast %1 : i32 to index
    %c0_8 = arith.constant 0 : index
    %34 = vector.load %arg7[%33, %c0_8] : memref<128x1xf32, #tpu.memory_space<vmem>>, vector<128x1xf32>
    tpu.vector_store %arg7[%33, %c0_8], %32 {strides = array<i32>} : memref<128x1xf32, #tpu.memory_space<vmem>>, vector<128x1xf32>,
    %c1_i32 = arith.constant 1 : i32
    return
  }
  func.func @transform_0(%arg0: i32) -> (i32, i32) {
    %c0_i32 = arith.constant 0 : i32
    %c0_i32_0 = arith.constant 0 : i32
    return %arg0, %c0_i32 : i32, i32
  }
  func.func @transform_1(%arg0: i32) -> (i32, i32) {
    %c0_i32 = arith.constant 0 : i32
    %c0_i32_0 = arith.constant 0 : i32
    return %arg0, %c0_i32 : i32, i32
  }
  func.func @transform_2(%arg0: i32) -> (i32, i32) {
    %c0_i32 = arith.constant 0 : i32
    %c0_i32_0 = arith.constant 0 : i32
    return %arg0, %c0_i32 : i32, i32
  }
  func.func @transform_3(%arg0: i32) -> (i32, i32) {
    %c0_i32 = arith.constant 0 : i32
    %c0_i32_0 = arith.constant 0 : i32
    return %arg0, %c0_i32 : i32, i32
  }
  func.func @transform_4(%arg0: i32) -> (i32, i32) {
    %c0_i32 = arith.constant 0 : i32
    %c0_i32_0 = arith.constant 0 : i32
    return %arg0, %c0_i32 : i32, i32
  }
  func.func @transform_5(%arg0: i32) -> (i32, i32) {
    %c0_i32 = arith.constant 0 : i32
    %c0_i32_0 = arith.constant 0 : i32
    return %arg0, %c0_i32 : i32, i32
  }
  func.func @transform_6(%arg0: i32) -> (i32, i32) {
    %c0_i32 = arith.constant 0 : i32
    %c0_i32_0 = arith.constant 0 : i32
    return %arg0, %c0_i32 : i32, i32
  }
}

</mosaic_0001>

<llo_original>
// kernel: tpu_custom_call.1
$region0: #{tpu_custom_call.1}
  #allocation0 [shape = 'u32[]', space=smem, size = 0x4, offset = 0x4, fixed_abs, tag = 'smem constant byte address 0x4 - core index']
  #allocation1 [shape = 'u32[72,128]{1,0:T(1,128)}', space=vmem, size = 0x9000, scoped, tag = 'internal scratch']
  %s0 = inlined_call_operand.vmem [shape: bf16[128,32], index: 0, kind: input, shape index: {}]
  %s1 = inlined_call_operand.vmem [shape: bf16[128,32], index: 1, kind: input, shape index: {}]
  %s2 = inlined_call_operand.vmem [shape: bf16[128,32], index: 2, kind: input, shape index: {}]
  %s3 = inlined_call_operand.vmem [shape: bf16[128,32], index: 3, kind: input, shape index: {}]
  %s4 = inlined_call_operand.vmem [shape: bf16[128,32], index: 4, kind: input, shape index: {}]
  %s5 = inlined_call_operand.vmem [shape: bf16[128,32], index: 5, kind: input, shape index: {}]
  %s6 = inlined_call_operand.vmem [shape: f32[128,1], index: 6, kind: output, shape index: {}]
  %s7 = sld [smem:[#allocation0]]
  $region34: #{tpu_custom_call.1} parent=0
    _
  %s9 = ssub.s32 1, %s7
  %s10 = scalar_select 0, %s9, %s7
  // Predicated region
  $region2: #{tpu_custom_call.1} parent=0 // pred_check
    _
  $region3: #{tpu_custom_call.1} parent=0 // pred_check_branch
    %12 = sbr.rel (0) target = $region5
  $region4: #{tpu_custom_call.1} parent=0 // pred_region
    _
  $region5: #{tpu_custom_call.1} parent=0 // pred_fallthru
    _
  // Predicated region
  $region6: #{tpu_custom_call.1} parent=0 // pred_check
    _
  $region7: #{tpu_custom_call.1} parent=0 // pred_check_branch
    %14 = sbr.rel (0) target = $region9
  $region8: #{tpu_custom_call.1} parent=0 // pred_region
    _
  $region9: #{tpu_custom_call.1} parent=0 // pred_fallthru
    _
  // Predicated region
  $region10: #{tpu_custom_call.1} parent=0 // pred_check
    _
  $region11: #{tpu_custom_call.1} parent=0 // pred_check_branch
    %16 = sbr.rel (0) target = $region13
  $region12: #{tpu_custom_call.1} parent=0 // pred_region
    _
  $region13: #{tpu_custom_call.1} parent=0 // pred_fallthru
    _
  // Predicated region
  $region14: #{tpu_custom_call.1} parent=0 // pred_check
    _
  $region15: #{tpu_custom_call.1} parent=0 // pred_check_branch
    %18 = sbr.rel (0) target = $region17
  $region16: #{tpu_custom_call.1} parent=0 // pred_region
    _
  $region17: #{tpu_custom_call.1} parent=0 // pred_fallthru
    _
  // Predicated region
  $region18: #{tpu_custom_call.1} parent=0 // pred_check
    _
  $region19: #{tpu_custom_call.1} parent=0 // pred_check_branch
    %20 = sbr.rel (0) target = $region21
  $region20: #{tpu_custom_call.1} parent=0 // pred_region
    _
  $region21: #{tpu_custom_call.1} parent=0 // pred_fallthru
    _
  // Predicated region
  $region22: #{tpu_custom_call.1} parent=0 // pred_check
    _
  $region23: #{tpu_custom_call.1} parent=0 // pred_check_branch
    %22 = sbr.rel (0) target = $region25
  $region24: #{tpu_custom_call.1} parent=0 // pred_region
    _
  $region25: #{tpu_custom_call.1} parent=0 // pred_fallthru
    _
  %v23 = vld [vmem:[%s0] sm:$0xf]
  %v24 = vld [vmem:[%s0 + $0x4] sm:$0xf]
  %v25 = vld [vmem:[%s0 + $0x8] sm:$0xf]
  %v26 = vld [vmem:[%s0 + $0xc] sm:$0xf]
  %v27 = vld [vmem:[%s0 + $0x10] sm:$0xf]
  %v28 = vld [vmem:[%s0 + $0x14] sm:$0xf]
  %v29 = vld [vmem:[%s0 + $0x18] sm:$0xf]
  %v30 = vld [vmem:[%s0 + $0x1c] sm:$0xf]
  %v31 = vld [vmem:[%s0 + $0x20] sm:$0xf]
  %v32 = vld [vmem:[%s0 + $0x24] sm:$0xf]
  %v33 = vld [vmem:[%s0 + $0x28] sm:$0xf]
  %v34 = vld [vmem:[%s0 + $0x2c] sm:$0xf]
  %v35 = vld [vmem:[%s0 + $0x30] sm:$0xf]
  %v36 = vld [vmem:[%s0 + $0x34] sm:$0xf]
  %v37 = vld [vmem:[%s0 + $0x38] sm:$0xf]
  %v38 = vld [vmem:[%s0 + $0x3c] sm:$0xf]
  %v39 = vunpack.c.l.bf16 %v23
  %v40 = vunpack.c.l.bf16 %v24
  %v41 = vunpack.c.l.bf16 %v25
  %v42 = vunpack.c.l.bf16 %v26
  %v43 = vunpack.c.l.bf16 %v27
  %v44 = vunpack.c.l.bf16 %v28
  %v45 = vunpack.c.l.bf16 %v29
  %v46 = vunpack.c.l.bf16 %v30
  %v47 = vunpack.c.l.bf16 %v31
  %v48 = vunpack.c.l.bf16 %v32
  %v49 = vunpack.c.l.bf16 %v33
  %v50 = vunpack.c.l.bf16 %v34
  %v51 = vunpack.c.l.bf16 %v35
  %v52 = vunpack.c.l.bf16 %v36
  %v53 = vunpack.c.l.bf16 %v37
  %v54 = vunpack.c.l.bf16 %v38
  %v55 = vld [vmem:[%s1] sm:$0xf]
  %v56 = vld [vmem:[%s1 + $0x4] sm:$0xf]
  %v57 = vld [vmem:[%s1 + $0x8] sm:$0xf]
  %v58 = vld [vmem:[%s1 + $0xc] sm:$0xf]
  %v59 = vld [vmem:[%s1 + $0x10] sm:$0xf]
  %v60 = vld [vmem:[%s1 + $0x14] sm:$0xf]
  %v61 = vld [vmem:[%s1 + $0x18] sm:$0xf]
  %v62 = vld [vmem:[%s1 + $0x1c] sm:$0xf]
  %v63 = vld [vmem:[%s1 + $0x20] sm:$0xf]
  %v64 = vld [vmem:[%s1 + $0x24] sm:$0xf]
  %v65 = vld [vmem:[%s1 + $0x28] sm:$0xf]
  %v66 = vld [vmem:[%s1 + $0x2c] sm:$0xf]
  %v67 = vld [vmem:[%s1 + $0x30] sm:$0xf]
  %v68 = vld [vmem:[%s1 + $0x34] sm:$0xf]
  %v69 = vld [vmem:[%s1 + $0x38] sm:$0xf]
  %v70 = vld [vmem:[%s1 + $0x3c] sm:$0xf]
  %v71 = vunpack.c.l.bf16 %v55
  %v72 = vunpack.c.l.bf16 %v56
  %v73 = vunpack.c.l.bf16 %v57
  %v74 = vunpack.c.l.bf16 %v58
  %v75 = vunpack.c.l.bf16 %v59
  %v76 = vunpack.c.l.bf16 %v60
  %v77 = vunpack.c.l.bf16 %v61
  %v78 = vunpack.c.l.bf16 %v62
  %v79 = vunpack.c.l.bf16 %v63
  %v80 = vunpack.c.l.bf16 %v64
  %v81 = vunpack.c.l.bf16 %v65
  %v82 = vunpack.c.l.bf16 %v66
  %v83 = vunpack.c.l.bf16 %v67
  %v84 = vunpack.c.l.bf16 %v68
  %v85 = vunpack.c.l.bf16 %v69
  %v86 = vunpack.c.l.bf16 %v70
  %v87 = vld [vmem:[%s2] sm:$0xf]
  %v88 = vld [vmem:[%s2 + $0x4] sm:$0xf]
  %v89 = vld [vmem:[%s2 + $0x8] sm:$0xf]
  %v90 = vld [vmem:[%s2 + $0xc] sm:$0xf]
  %v91 = vld [vmem:[%s2 + $0x10] sm:$0xf]
  %v92 = vld [vmem:[%s2 + $0x14] sm:$0xf]
  %v93 = vld [vmem:[%s2 + $0x18] sm:$0xf]
  %v94 = vld [vmem:[%s2 + $0x1c] sm:$0xf]
  %v95 = vld [vmem:[%s2 + $0x20] sm:$0xf]
  %v96 = vld [vmem:[%s2 + $0x24] sm:$0xf]
  %v97 = vld [vmem:[%s2 + $0x28] sm:$0xf]
  %v98 = vld [vmem:[%s2 + $0x2c] sm:$0xf]
  %v99 = vld [vmem:[%s2 + $0x30] sm:$0xf]
  %v100 = vld [vmem:[%s2 + $0x34] sm:$0xf]
  %v101 = vld [vmem:[%s2 + $0x38] sm:$0xf]
  %v102 = vld [vmem:[%s2 + $0x3c] sm:$0xf]
  %v103 = vunpack.c.l.bf16 %v87
  %v104 = vunpack.c.l.bf16 %v88
  %v105 = vunpack.c.l.bf16 %v89
  %v106 = vunpack.c.l.bf16 %v90
  %v107 = vunpack.c.l.bf16 %v91
  %v108 = vunpack.c.l.bf16 %v92
  %v109 = vunpack.c.l.bf16 %v93
  %v110 = vunpack.c.l.bf16 %v94
  %v111 = vunpack.c.l.bf16 %v95
  %v112 = vunpack.c.l.bf16 %v96
  %v113 = vunpack.c.l.bf16 %v97
  %v114 = vunpack.c.l.bf16 %v98
  %v115 = vunpack.c.l.bf16 %v99
  %v116 = vunpack.c.l.bf16 %v100
  %v117 = vunpack.c.l.bf16 %v101
  %v118 = vunpack.c.l.bf16 %v102
  %v119 = vld [vmem:[%s3] sm:$0xf]
  %v120 = vld [vmem:[%s3 + $0x4] sm:$0xf]
  %v121 = vld [vmem:[%s3 + $0x8] sm:$0xf]
  %v122 = vld [vmem:[%s3 + $0xc] sm:$0xf]
  %v123 = vld [vmem:[%s3 + $0x10] sm:$0xf]
  %v124 = vld [vmem:[%s3 + $0x14] sm:$0xf]
  %v125 = vld [vmem:[%s3 + $0x18] sm:$0xf]
  %v126 = vld [vmem:[%s3 + $0x1c] sm:$0xf]
  %v127 = vld [vmem:[%s3 + $0x20] sm:$0xf]
  %v128 = vld [vmem:[%s3 + $0x24] sm:$0xf]
  %v129 = vld [vmem:[%s3 + $0x28] sm:$0xf]
  %v130 = vld [vmem:[%s3 + $0x2c] sm:$0xf]
  %v131 = vld [vmem:[%s3 + $0x30] sm:$0xf]
  %v132 = vld [vmem:[%s3 + $0x34] sm:$0xf]
  %v133 = vld [vmem:[%s3 + $0x38] sm:$0xf]
  %v134 = vld [vmem:[%s3 + $0x3c] sm:$0xf]
  %v135 = vunpack.c.l.bf16 %v119
  %v136 = vunpack.c.l.bf16 %v120
  %v137 = vunpack.c.l.bf16 %v121
  %v138 = vunpack.c.l.bf16 %v122
  %v139 = vunpack.c.l.bf16 %v123
  %v140 = vunpack.c.l.bf16 %v124
  %v141 = vunpack.c.l.bf16 %v125
  %v142 = vunpack.c.l.bf16 %v126
  %v143 = vunpack.c.l.bf16 %v127
  %v144 = vunpack.c.l.bf16 %v128
  %v145 = vunpack.c.l.bf16 %v129
  %v146 = vunpack.c.l.bf16 %v130
  %v147 = vunpack.c.l.bf16 %v131
  %v148 = vunpack.c.l.bf16 %v132
  %v149 = vunpack.c.l.bf16 %v133
  %v150 = vunpack.c.l.bf16 %v134
  %v151 = vld [vmem:[%s4] sm:$0xf]
  %v152 = vld [vmem:[%s4 + $0x4] sm:$0xf]
  %v153 = vld [vmem:[%s4 + $0x8] sm:$0xf]
  %v154 = vld [vmem:[%s4 + $0xc] sm:$0xf]
  %v155 = vld [vmem:[%s4 + $0x10] sm:$0xf]
  %v156 = vld [vmem:[%s4 + $0x14] sm:$0xf]
  %v157 = vld [vmem:[%s4 + $0x18] sm:$0xf]
  %v158 = vld [vmem:[%s4 + $0x1c] sm:$0xf]
  %v159 = vld [vmem:[%s4 + $0x20] sm:$0xf]
  %v160 = vld [vmem:[%s4 + $0x24] sm:$0xf]
  %v161 = vld [vmem:[%s4 + $0x28] sm:$0xf]
  %v162 = vld [vmem:[%s4 + $0x2c] sm:$0xf]
  %v163 = vld [vmem:[%s4 + $0x30] sm:$0xf]
  %v164 = vld [vmem:[%s4 + $0x34] sm:$0xf]
  %v165 = vld [vmem:[%s4 + $0x38] sm:$0xf]
  %v166 = vld [vmem:[%s4 + $0x3c] sm:$0xf]
  %v167 = vunpack.c.l.bf16 %v151
  %v168 = vunpack.c.l.bf16 %v152
  %v169 = vunpack.c.l.bf16 %v153
  %v170 = vunpack.c.l.bf16 %v154
  %v171 = vunpack.c.l.bf16 %v155
  %v172 = vunpack.c.l.bf16 %v156
  %v173 = vunpack.c.l.bf16 %v157
  %v174 = vunpack.c.l.bf16 %v158
  %v175 = vunpack.c.l.bf16 %v159
  %v176 = vunpack.c.l.bf16 %v160
  %v177 = vunpack.c.l.bf16 %v161
  %v178 = vunpack.c.l.bf16 %v162
  %v179 = vunpack.c.l.bf16 %v163
  %v180 = vunpack.c.l.bf16 %v164
  %v181 = vunpack.c.l.bf16 %v165
  %v182 = vunpack.c.l.bf16 %v166
  %v183 = vld [vmem:[%s5] sm:$0xf]
  %v184 = vld [vmem:[%s5 + $0x4] sm:$0xf]
  %v185 = vld [vmem:[%s5 + $0x8] sm:$0xf]
  %v186 = vld [vmem:[%s5 + $0xc] sm:$0xf]
  %v187 = vld [vmem:[%s5 + $0x10] sm:$0xf]
  %v188 = vld [vmem:[%s5 + $0x14] sm:$0xf]
  %v189 = vld [vmem:[%s5 + $0x18] sm:$0xf]
  %v190 = vld [vmem:[%s5 + $0x1c] sm:$0xf]
  %v191 = vld [vmem:[%s5 + $0x20] sm:$0xf]
  %v192 = vld [vmem:[%s5 + $0x24] sm:$0xf]
  %v193 = vld [vmem:[%s5 + $0x28] sm:$0xf]
  %v194 = vld [vmem:[%s5 + $0x2c] sm:$0xf]
  %v195 = vld [vmem:[%s5 + $0x30] sm:$0xf]
  %v196 = vld [vmem:[%s5 + $0x34] sm:$0xf]
  %v197 = vld [vmem:[%s5 + $0x38] sm:$0xf]
  %v198 = vld [vmem:[%s5 + $0x3c] sm:$0xf]
  %v199 = vunpack.c.l.bf16 %v183
  %v200 = vunpack.c.l.bf16 %v184
  %v201 = vunpack.c.l.bf16 %v185
  %v202 = vunpack.c.l.bf16 %v186
  %v203 = vunpack.c.l.bf16 %v187
  %v204 = vunpack.c.l.bf16 %v188
  %v205 = vunpack.c.l.bf16 %v189
  %v206 = vunpack.c.l.bf16 %v190
  %v207 = vunpack.c.l.bf16 %v191
  %v208 = vunpack.c.l.bf16 %v192
  %v209 = vunpack.c.l.bf16 %v193
  %v210 = vunpack.c.l.bf16 %v194
  %v211 = vunpack.c.l.bf16 %v195
  %v212 = vunpack.c.l.bf16 %v196
  %v213 = vunpack.c.l.bf16 %v197
  %v214 = vunpack.c.l.bf16 %v198
  %v215 = vmul.f32 %v39, %v167
  %v216 = vmul.f32 %v40, %v168
  %v217 = vmul.f32 %v41, %v169
  %v218 = vmul.f32 %v42, %v170
  %v219 = vmul.f32 %v43, %v171
  %v220 = vmul.f32 %v44, %v172
  %v221 = vmul.f32 %v45, %v173
  %v222 = vmul.f32 %v46, %v174
  %v223 = vmul.f32 %v47, %v175
  %v224 = vmul.f32 %v48, %v176
  %v225 = vmul.f32 %v49, %v177
  %v226 = vmul.f32 %v50, %v178
  %v227 = vmul.f32 %v51, %v179
  %v228 = vmul.f32 %v52, %v180
  %v229 = vmul.f32 %v53, %v181
  %v230 = vmul.f32 %v54, %v182
  %v231 = vmul.f32 %v215, %v135
  %v232 = vmul.f32 %v216, %v136
  %v233 = vmul.f32 %v217, %v137
  %v234 = vmul.f32 %v218, %v138
  %v235 = vmul.f32 %v219, %v139
  %v236 = vmul.f32 %v220, %v140
  %v237 = vmul.f32 %v221, %v141
  %v238 = vmul.f32 %v222, %v142
  %v239 = vmul.f32 %v223, %v143
  %v240 = vmul.f32 %v224, %v144
  %v241 = vmul.f32 %v225, %v145
  %v242 = vmul.f32 %v226, %v146
  %v243 = vmul.f32 %v227, %v147
  %v244 = vmul.f32 %v228, %v148
  %v245 = vmul.f32 %v229, %v149
  %v246 = vmul.f32 %v230, %v150
  %v247 = vmul.f32 %v71, %v199
  %v248 = vmul.f32 %v72, %v200
  %v249 = vmul.f32 %v73, %v201
  %v250 = vmul.f32 %v74, %v202
  %v251 = vmul.f32 %v75, %v203
  %v252 = vmul.f32 %v76, %v204
  %v253 = vmul.f32 %v77, %v205
  %v254 = vmul.f32 %v78, %v206
  %v255 = vmul.f32 %v79, %v207
  %v256 = vmul.f32 %v80, %v208
  %v257 = vmul.f32 %v81, %v209
  %v258 = vmul.f32 %v82, %v210
  %v259 = vmul.f32 %v83, %v211
  %v260 = vmul.f32 %v84, %v212
  %v261 = vmul.f32 %v85, %v213
  %v262 = vmul.f32 %v86, %v214
  %v263 = vmul.f32 %v247, %v103
  %v264 = vmul.f32 %v248, %v104
  %v265 = vmul.f32 %v249, %v105
  %v266 = vmul.f32 %v250, %v106
  %v267 = vmul.f32 %v251, %v107
  %v268 = vmul.f32 %v252, %v108
  %v269 = vmul.f32 %v253, %v109
  %v270 = vmul.f32 %v254, %v110
  %v271 = vmul.f32 %v255, %v111
  %v272 = vmul.f32 %v256, %v112
  %v273 = vmul.f32 %v257, %v113
  %v274 = vmul.f32 %v258, %v114
  %v275 = vmul.f32 %v259, %v115
  %v276 = vmul.f32 %v260, %v116
  %v277 = vmul.f32 %v261, %v117
  %v278 = vmul.f32 %v262, %v118
  %v279 = vadd.f32 %v231, %v263
  %v280 = vadd.f32 %v232, %v264
  %v281 = vadd.f32 %v233, %v265
  %v282 = vadd.f32 %v234, %v266
  %v283 = vadd.f32 %v235, %v267
  %v284 = vadd.f32 %v236, %v268
  %v285 = vadd.f32 %v237, %v269
  %v286 = vadd.f32 %v238, %v270
  %v287 = vadd.f32 %v239, %v271
  %v288 = vadd.f32 %v240, %v272
  %v289 = vadd.f32 %v241, %v273
  %v290 = vadd.f32 %v242, %v274
  %v291 = vadd.f32 %v243, %v275
  %v292 = vadd.f32 %v244, %v276
  %v293 = vadd.f32 %v245, %v277
  %v294 = vadd.f32 %v246, %v278
  %vm295 = vcmask 261120
  %v296 = vsel %vm295, %v279, 0.0
  %297 = vadd.xlane.f32.xlu0 %v296
  %v298 = vpop.xlane.xlu0 %297
  %v299 = vsel %vm295, %v280, 0.0
  %300 = vadd.xlane.f32.xlu0 %v299
  %v301 = vpop.xlane.xlu0 %300
  %v302 = vsel %vm295, %v281, 0.0
  %303 = vadd.xlane.f32.xlu0 %v302
  %v304 = vpop.xlane.xlu0 %303
  %v305 = vsel %vm295, %v282, 0.0
  %306 = vadd.xlane.f32.xlu0 %v305
  %v307 = vpop.xlane.xlu0 %306
  %v308 = vsel %vm295, %v283, 0.0
  %309 = vadd.xlane.f32.xlu0 %v308
  %v310 = vpop.xlane.xlu0 %309
  %v311 = vsel %vm295, %v284, 0.0
  %312 = vadd.xlane.f32.xlu0 %v311
  %v313 = vpop.xlane.xlu0 %312
  %v314 = vsel %vm295, %v285, 0.0
  %315 = vadd.xlane.f32.xlu0 %v314
  %v316 = vpop.xlane.xlu0 %315
  %v317 = vsel %vm295, %v286, 0.0
  %318 = vadd.xlane.f32.xlu0 %v317
  %v319 = vpop.xlane.xlu0 %318
  %v320 = vsel %vm295, %v287, 0.0
  %321 = vadd.xlane.f32.xlu0 %v320
  %v322 = vpop.xlane.xlu0 %321
  %v323 = vsel %vm295, %v288, 0.0
  %324 = vadd.xlane.f32.xlu0 %v323
  %v325 = vpop.xlane.xlu0 %324
  %v326 = vsel %vm295, %v289, 0.0
  %327 = vadd.xlane.f32.xlu0 %v326
  %v328 = vpop.xlane.xlu0 %327
  %v329 = vsel %vm295, %v290, 0.0
  %330 = vadd.xlane.f32.xlu0 %v329
  %v331 = vpop.xlane.xlu0 %330
  %v332 = vsel %vm295, %v291, 0.0
  %333 = vadd.xlane.f32.xlu0 %v332
  %v334 = vpop.xlane.xlu0 %333
  %v335 = vsel %vm295, %v292, 0.0
  %336 = vadd.xlane.f32.xlu0 %v335
  %v337 = vpop.xlane.xlu0 %336
  %v338 = vsel %vm295, %v293, 0.0
  %339 = vadd.xlane.f32.xlu0 %v338
  %v340 = vpop.xlane.xlu0 %339
  %v341 = vsel %vm295, %v294, 0.0
  %342 = vadd.xlane.f32.xlu0 %v341
  %v343 = vpop.xlane.xlu0 %342
  %v344 = vmul.f32 %v298, 0.5
  %v345 = vmul.f32 %v301, 0.5
  %v346 = vmul.f32 %v304, 0.5
  %v347 = vmul.f32 %v307, 0.5
  %v348 = vmul.f32 %v310, 0.5
  %v349 = vmul.f32 %v313, 0.5
  %v350 = vmul.f32 %v316, 0.5
  %v351 = vmul.f32 %v319, 0.5
  %v352 = vmul.f32 %v322, 0.5
  %v353 = vmul.f32 %v325, 0.5
  %v354 = vmul.f32 %v328, 0.5
  %v355 = vmul.f32 %v331, 0.5
  %v356 = vmul.f32 %v334, 0.5
  %v357 = vmul.f32 %v337, 0.5
  %v358 = vmul.f32 %v340, 0.5
  %v359 = vmul.f32 %v343, 0.5
  %v360 = vmax.f32 %v344, -20.0
  %v361 = vmax.f32 %v345, -20.0
  %v362 = vmax.f32 %v346, -20.0
  %v363 = vmax.f32 %v347, -20.0
  %v364 = vmax.f32 %v348, -20.0
  %v365 = vmax.f32 %v349, -20.0
  %v366 = vmax.f32 %v350, -20.0
  %v367 = vmax.f32 %v351, -20.0
  %v368 = vmax.f32 %v352, -20.0
  %v369 = vmax.f32 %v353, -20.0
  %v370 = vmax.f32 %v354, -20.0
  %v371 = vmax.f32 %v355, -20.0
  %v372 = vmax.f32 %v356, -20.0
  %v373 = vmax.f32 %v357, -20.0
  %v374 = vmax.f32 %v358, -20.0
  %v375 = vmax.f32 %v359, -20.0
  %v376 = vmin.f32 %v360, 20.0
  %v377 = vmin.f32 %v361, 20.0
  %v378 = vmin.f32 %v362, 20.0
  %v379 = vmin.f32 %v363, 20.0
  %v380 = vmin.f32 %v364, 20.0
  %v381 = vmin.f32 %v365, 20.0
  %v382 = vmin.f32 %v366, 20.0
  %v383 = vmin.f32 %v367, 20.0
  %v384 = vmin.f32 %v368, 20.0
  %v385 = vmin.f32 %v369, 20.0
  %v386 = vmin.f32 %v370, 20.0
  %v387 = vmin.f32 %v371, 20.0
  %v388 = vmin.f32 %v372, 20.0
  %v389 = vmin.f32 %v373, 20.0
  %v390 = vmin.f32 %v374, 20.0
  %v391 = vmin.f32 %v375, 20.0
  %vm392 = vcmask 7168
  %393 = vst.msk [vmem:[%s6] sm:$0xff] %vm392, %v376
  %394 = vst.msk [vmem:[%s6 + $0x8] sm:$0xff] %vm392, %v377
  %395 = vst.msk [vmem:[%s6 + $0x10] sm:$0xff] %vm392, %v378
  %396 = vst.msk [vmem:[%s6 + $0x18] sm:$0xff] %vm392, %v379
  %397 = vst.msk [vmem:[%s6 + $0x20] sm:$0xff] %vm392, %v380
  %398 = vst.msk [vmem:[%s6 + $0x28] sm:$0xff] %vm392, %v381
  %399 = vst.msk [vmem:[%s6 + $0x30] sm:$0xff] %vm392, %v382
  %400 = vst.msk [vmem:[%s6 + $0x38] sm:$0xff] %vm392, %v383
  %401 = vst.msk [vmem:[%s6 + $0x40] sm:$0xff] %vm392, %v384
  %402 = vst.msk [vmem:[%s6 + $0x48] sm:$0xff] %vm392, %v385
  %403 = vst.msk [vmem:[%s6 + $0x50] sm:$0xff] %vm392, %v386
  %404 = vst.msk [vmem:[%s6 + $0x58] sm:$0xff] %vm392, %v387
  %405 = vst.msk [vmem:[%s6 + $0x60] sm:$0xff] %vm392, %v388
  %406 = vst.msk [vmem:[%s6 + $0x68] sm:$0xff] %vm392, %v389
  %407 = vst.msk [vmem:[%s6 + $0x70] sm:$0xff] %vm392, %v390
  %408 = vst.msk [vmem:[%s6 + $0x78] sm:$0xff] %vm392, %v391
  // Predicated region
  $region26: #{tpu_custom_call.1} parent=0 // pred_check
    _
  $region27: #{tpu_custom_call.1} parent=0 // pred_check_branch
    %410 = sbr.rel (0) target = $region29
  $region28: #{tpu_custom_call.1} parent=0 // pred_region
    _
  $region29: #{tpu_custom_call.1} parent=0 // pred_fallthru
    _
  // Predicated region
  $region30: #{tpu_custom_call.1} parent=0 // pred_check
    _
  $region31: #{tpu_custom_call.1} parent=0 // pred_check_branch
    %412 = sbr.rel (0) target = $region33
  $region32: #{tpu_custom_call.1} parent=0 // pred_region
    _
  $region33: #{tpu_custom_call.1} parent=0 // pred_fallthru
    _

</llo_original>
